<compile_context>
chip_gen: v7x
topology: tpu7x:2x2x1
jax: 0.10.0
libtpu: 0.0.40
codegen_flags: <defaults>
</compile_context>

<pallas_src>
import functools

import jax
import jax.numpy as jnp
from jax.experimental import pallas as pl
from jax.experimental.pallas import tpu as pltpu


def _round_up(x: int, m: int) -> int:
    return ((x + m - 1) // m) * m


def _scale_linear_kernel_f32(scale_ref, x_ref, w_ref, b_ref, o_ref):
    """(x @ W + b) * value, accumulating directly into the f32 output tile."""
    k = pl.program_id(2)

    @pl.when(k == 0)
    def _():
        # Fold the bias into the accumulator init (zero-init + bias add merged
        # into one VPU pass).
        o_ref[...] = jnp.broadcast_to(
            b_ref[...].astype(jnp.float32), o_ref.shape
        )

    o_ref[...] += jnp.dot(
        x_ref[...], w_ref[...], preferred_element_type=jnp.float32
    )

    @pl.when(k == pl.num_programs(2) - 1)
    def _():
        o_ref[...] = o_ref[...] * scale_ref[0]   # scalar from SMEM (prefetched)


def _scale_linear_kernel_acc(scale_ref, x_ref, w_ref, b_ref, o_ref, acc_ref):
    """Same computation, but with an f32 scratch accumulator for narrow out dtypes."""
    k = pl.program_id(2)

    @pl.when(k == 0)
    def _():
        acc_ref[...] = jnp.broadcast_to(
            b_ref[...].astype(jnp.float32), acc_ref.shape
        )

    acc_ref[...] += jnp.dot(
        x_ref[...], w_ref[...], preferred_element_type=jnp.float32
    )

    @pl.when(k == pl.num_programs(2) - 1)
    def _():
        o_ref[...] = (acc_ref[...] * scale_ref[0]).astype(o_ref.dtype)


@functools.partial(jax.jit, static_argnames=("tm", "tn", "tk", "compute_dtype"))
def scale_forward(x, w, b, value, *, tm=512, tn=1024, tk=1024,
                  compute_dtype=jnp.bfloat16):
    """Apply Scale(value, Linear(w, b)) to x of shape (batch, seq, hidden).

    Returns (scaled_output,) mirroring the PyTorch module's
    (fn(x) * value, *rest) convention (rest is empty for a Linear fn).
    """
    batch, seq, d_in = x.shape
    d_out = w.shape[1]
    m = batch * seq
    out_dtype = x.dtype

    # ---- clamp tile sizes to the (hardware-aligned) problem dims ------------
    tm = min(tm, _round_up(m, 8))          # sublane multiple
    tn = min(tn, _round_up(d_out, 128))    # lane multiple
    tk = min(tk, _round_up(d_in, 128))     # lane multiple

    # Only K needs true zero padding (garbage along K would corrupt valid
    # outputs).  M/N edges are handled by Pallas masked edge tiles.
    k_pad = _round_up(d_in, tk)

    x2d = x.reshape(m, d_in)
    w2d = w
    if k_pad != d_in:
        x2d = jnp.pad(x2d, ((0, 0), (0, k_pad - d_in)))
        w2d = jnp.pad(w2d, ((0, k_pad - d_in), (0, 0)))

    # bf16 operands feed the MXU at its native rate; the f32 accumulator and
    # f32 epilogue (bias + scale) are unchanged.
    if compute_dtype is not None:
        if x2d.dtype != compute_dtype:
            x2d = x2d.astype(compute_dtype)
        if w2d.dtype != compute_dtype:
            w2d = w2d.astype(compute_dtype)

    b2d = b.reshape(1, d_out).astype(jnp.float32)
    scale_arr = jnp.full((1,), value, dtype=jnp.float32)

    grid_m = pl.cdiv(m, tm)
    grid_n = pl.cdiv(d_out, tn)
    grid_k = k_pad // tk
    grid = (grid_m, grid_n, grid_k)

    use_acc = jnp.dtype(out_dtype) != jnp.dtype(jnp.float32)
    kernel = _scale_linear_kernel_acc if use_acc else _scale_linear_kernel_f32
    scratch = [pltpu.VMEM((tm, tn), jnp.float32)] if use_acc else []

    in_itemsize = jnp.dtype(x2d.dtype).itemsize
    out_itemsize = jnp.dtype(out_dtype).itemsize

    cost = pl.CostEstimate(
        flops=2 * m * d_out * k_pad,
        transcendentals=0,
        bytes_accessed=int(
            grid_n * m * k_pad * in_itemsize        # x re-streamed per N tile
            + grid_m * k_pad * d_out * in_itemsize  # W re-streamed per M tile
            + grid_m * d_out * 4                    # bias
            + m * d_out * out_itemsize              # output written once
        ),
    )

    # Double-buffered tile footprint + headroom, capped so the scoped budget
    # stays inside v7x's 64 MiB physical VMEM (minus compiler internal scratch).
    est_vmem = 2 * (
        tm * tk * in_itemsize + tk * tn * in_itemsize + tm * tn * out_itemsize
    ) + (tm * tn * 4 if use_acc else 0)
    vmem_limit = int(min(max(2 * est_vmem, 32 << 20), 48 << 20))

    out2d = pl.pallas_call(
        kernel,
        out_shape=jax.ShapeDtypeStruct((m, d_out), out_dtype),
        grid_spec=pltpu.PrefetchScalarGridSpec(
            num_scalar_prefetch=1,          # `value` -> SMEM, read in epilogue
            grid=grid,
            in_specs=[
                pl.BlockSpec((tm, tk), lambda i, j, k, s: (i, k)),
                pl.BlockSpec((tk, tn), lambda i, j, k, s: (k, j)),
                pl.BlockSpec((1, tn), lambda i, j, k, s: (0, j)),
            ],
            out_specs=pl.BlockSpec((tm, tn), lambda i, j, k, s: (i, j)),
            scratch_shapes=scratch,
        ),
        compiler_params=pltpu.CompilerParams(
            dimension_semantics=("parallel", "parallel", "arbitrary"),
            vmem_limit_bytes=vmem_limit,
        ),
        cost_estimate=cost,
    )(scale_arr, x2d, w2d, b2d)

    out = out2d.reshape(batch, seq, d_out)
    return (out,)


if __name__ == "__main__":
    key = jax.random.PRNGKey(0)
    k_x, k_w, k_b = jax.random.split(key, 3)

    batch, seq, hidden = 2, 8, 32
    value = 0.5  # the Scale module's scalar `value`

    x = jax.random.normal(k_x, (batch, seq, hidden), dtype=jnp.float32)
    # deterministic parameters for the inner fn (Linear hidden -> hidden)
    w = jax.random.normal(k_w, (hidden, hidden), dtype=jnp.float32) * 0.02
    b = jax.random.normal(k_b, (hidden,), dtype=jnp.float32) * 0.02

    (out,) = scale_forward(x, w, b, value)
    out = jax.block_until_ready(out)

    # Reference with the same bf16 input rounding (accumulation in f32).
    xb = x.astype(jnp.bfloat16).astype(jnp.float32).reshape(-1, hidden)
    wb = w.astype(jnp.bfloat16).astype(jnp.float32)
    ref = ((xb @ wb + b) * value).reshape(batch, seq, hidden)
    assert out.shape == ref.shape, "shape mismatch vs reference"
    assert jnp.allclose(out, ref, atol=2e-4, rtol=2e-4), "mismatch vs bf16 reference"

    # Loose sanity check against the full-precision Scale(value, Linear) math.
    ref_f32 = ((x.reshape(-1, hidden) @ w + b) * value).reshape(batch, seq, hidden)
    assert jnp.allclose(out, ref_f32, atol=5e-2, rtol=5e-2), "mismatch vs f32 reference"

    print("KERNEL_OK")
</pallas_src>

<mosaic_0001>
module attributes {stable_mosaic.version = 11 : i64} {
  func.func @_scale_linear_kernel_f32(%arg0: i32, %arg1: i32, %arg2: i32, %arg3: memref<1xf32, #tpu.memory_space<smem>>, %arg4: memref<16x128xbf16, #tpu.memory_space<vmem>>, %arg5: memref<128x128xbf16, #tpu.memory_space<vmem>>, %arg6: memref<1x128xf32, #tpu.memory_space<vmem>>, %arg7: memref<16x128xf32, #tpu.memory_space<vmem>>) attributes {dimension_semantics = [#tpu.dimension_semantics<parallel>, #tpu.dimension_semantics<parallel>, #tpu.dimension_semantics<arbitrary>], iteration_bounds = array<i64: 1, 1, 1>, scalar_prefetch = 1 : i64, scratch_operands = 0 : i64, tpu.core_type = #tpu.core_type<tc>, window_params = [{transform_indices = @transform_0, window_bounds = array<i64: 16, 128>}, {transform_indices = @transform_1, window_bounds = array<i64: 128, 128>}, {transform_indices = @transform_2, window_bounds = array<i64: 1, 128>}, {transform_indices = @transform_3, window_bounds = array<i64: 16, 128>}]} {
    %c0_i32 = arith.constant 0 : i32
    %0 = arith.cmpi eq, %arg2, %c0_i32 : i32
    %1 = arith.extui %0 : i1 to i32
    %c0_i32_0 = arith.constant 0 : i32
    %2 = arith.cmpi ne, %1, %c0_i32_0 : i32
    scf.if %2 {
      %c0_10 = arith.constant 0 : index
      %c0_11 = arith.constant 0 : index
      %12 = vector.load %arg6[%c0_10, %c0_11] : memref<1x128xf32, #tpu.memory_space<vmem>>, vector<1x128xf32>
      %13 = vector.shape_cast %12 : vector<1x128xf32> to vector<1x128xf32>
      %14 = vector.broadcast %13 : vector<1x128xf32> to vector<16x128xf32>
      %c0_12 = arith.constant 0 : index
      %c0_13 = arith.constant 0 : index
      %15 = vector.load %arg7[%c0_12, %c0_13] : memref<16x128xf32, #tpu.memory_space<vmem>>, vector<16x128xf32>
      tpu.vector_store %arg7[%c0_12, %c0_13], %14 {strides = array<i32>} : memref<16x128xf32, #tpu.memory_space<vmem>>, vector<16x128xf32>,
    } else {
    }
    %c0 = arith.constant 0 : index
    %c0_1 = arith.constant 0 : index
    %3 = vector.load %arg7[%c0, %c0_1] : memref<16x128xf32, #tpu.memory_space<vmem>>, vector<16x128xf32>
    %c0_2 = arith.constant 0 : index
    %c0_3 = arith.constant 0 : index
    %4 = vector.load %arg4[%c0_2, %c0_3] : memref<16x128xbf16, #tpu.memory_space<vmem>>, vector<16x128xbf16>
    %c0_4 = arith.constant 0 : index
    %c0_5 = arith.constant 0 : index
    %5 = vector.load %arg5[%c0_4, %c0_5] : memref<128x128xbf16, #tpu.memory_space<vmem>>, vector<128x128xbf16>
    %cst = arith.constant dense<0.000000e+00> : vector<16x128xf32>
    %6 = tpu.matmul %4, %5, %cst {dimension_numbers = #tpu.dot_dimension_numbers<[1], [0], [0], [1], [0, 0, 1, 1], [], []>} : vector<16x128xbf16>, vector<128x128xbf16>, vector<16x128xf32> -> vector<16x128xf32>
    %7 = arith.addf %3, %6 : vector<16x128xf32>
    %c0_6 = arith.constant 0 : index
    %c0_7 = arith.constant 0 : index
    %8 = vector.load %arg7[%c0_6, %c0_7] : memref<16x128xf32, #tpu.memory_space<vmem>>, vector<16x128xf32>
    tpu.vector_store %arg7[%c0_6, %c0_7], %7 {strides = array<i32>} : memref<16x128xf32, #tpu.memory_space<vmem>>, vector<16x128xf32>,
    %c0_i32_8 = arith.constant 0 : i32
    %9 = arith.cmpi eq, %arg2, %c0_i32_8 : i32
    %10 = arith.extui %9 : i1 to i32
    %c0_i32_9 = arith.constant 0 : i32
    %11 = arith.cmpi ne, %10, %c0_i32_9 : i32
    scf.if %11 {
      %c0_10 = arith.constant 0 : index
      %c0_11 = arith.constant 0 : index
      %12 = vector.load %arg7[%c0_10, %c0_11] : memref<16x128xf32, #tpu.memory_space<vmem>>, vector<16x128xf32>
      %c0_12 = arith.constant 0 : index
      %13 = memref.load %arg3[%c0_12] : memref<1xf32, #tpu.memory_space<smem>>
      %14 = vector.broadcast %13 : f32 to vector<16x128xf32>
      %15 = arith.mulf %12, %14 : vector<16x128xf32>
      %c0_13 = arith.constant 0 : index
      %c0_14 = arith.constant 0 : index
      %16 = vector.load %arg7[%c0_13, %c0_14] : memref<16x128xf32, #tpu.memory_space<vmem>>, vector<16x128xf32>
      tpu.vector_store %arg7[%c0_13, %c0_14], %15 {strides = array<i32>} : memref<16x128xf32, #tpu.memory_space<vmem>>, vector<16x128xf32>,
    } else {
    }
    return
  }
  func.func @transform_0(%arg0: i32, %arg1: i32, %arg2: i32, %arg3: memref<1xf32, #tpu.memory_space<smem>>) -> (i32, i32) {
    %c0_i32 = arith.constant 0 : i32
    return %arg0, %arg2 : i32, i32
  }
  func.func @transform_1(%arg0: i32, %arg1: i32, %arg2: i32, %arg3: memref<1xf32, #tpu.memory_space<smem>>) -> (i32, i32) {
    %c0_i32 = arith.constant 0 : i32
    return %arg2, %arg1 : i32, i32
  }
  func.func @transform_2(%arg0: i32, %arg1: i32, %arg2: i32, %arg3: memref<1xf32, #tpu.memory_space<smem>>) -> (i32, i32) {
    %c0_i32 = arith.constant 0 : i32
    %c0_i32_0 = arith.constant 0 : i32
    return %c0_i32, %arg1 : i32, i32
  }
  func.func @transform_3(%arg0: i32, %arg1: i32, %arg2: i32, %arg3: memref<1xf32, #tpu.memory_space<smem>>) -> (i32, i32) {
    %c0_i32 = arith.constant 0 : i32
    return %arg0, %arg1 : i32, i32
  }
}

</mosaic_0001>

<llo_original>
// kernel: scale_forward.1
$region0: #{scale_forward.1}
  #allocation0 [shape = 'u32[]', space=smem, size = 0x4, offset = 0x4, fixed_abs, tag = 'smem constant byte address 0x4 - core index']
  #allocation1 [shape = 'u32[144,128]{1,0:T(1,128)}', space=vmem, size = 0x12000, scoped, tag = 'internal scratch']
  #allocation2 [shape = 's32[1]{0}', space=sflag, size = 0x4, scoped, tag = 'scoped memory for scale_forward.1']
  #allocation3 [shape = 'f32[1]{0:T(128)S(6)}', space=smem, size = 0x200, scoped, tag = 'prefetched SMEM operand 0']
  %s0 = inlined_call_operand.<no memory space> [shape: f32[1], index: 0, kind: input, shape index: {}]
  %s1 = inlined_call_operand.vmem [shape: bf16[16,128], index: 1, kind: input, shape index: {}]
  %s2 = inlined_call_operand.vmem [shape: bf16[128,32], index: 2, kind: input, shape index: {}]
  %s3 = inlined_call_operand.vmem [shape: f32[1,32], index: 3, kind: input, shape index: {}]
  %s4 = inlined_call_operand.hbm [shape: f32[16,32], index: 4, kind: output, shape index: {}]
  %s5 = sld [smem:[#allocation0]]
  $region30: #{scale_forward.1} parent=0
    _
  %s7 = ssub.s32 1, %s5
  %s8 = scalar_select 0, %s7, %s5
  %9 = sst [smem:[#allocation3]] %s0
  $region1: #{scale_forward.1} parent=0
    #allocation4 [shape = 'u8[8192]{0}', space=vmem, size = 0x2000, scoped, tag = 'output window, operand 0, single buffered']
    #allocation5 [shape = 's32[1]{0}', space=sflag, size = 0x4, scoped, tag = 'scoped memory for scale_forward.1']
    %10 = vsyncpa [#allocation5], 0
    // Predicated region
    $region2: #{scale_forward.1} parent=1 // pred_check
      _
    $region3: #{scale_forward.1} parent=1 // pred_check_branch
      %12 = sbr.rel (0) target = $region5
    $region4: #{scale_forward.1} parent=1 // pred_region
      _
    $region5: #{scale_forward.1} parent=1 // pred_fallthru
      _
    // Predicated region
    $region6: #{scale_forward.1} parent=1 // pred_check
      _
    $region7: #{scale_forward.1} parent=1 // pred_check_branch
      %14 = sbr.rel (0) target = $region9
    $region8: #{scale_forward.1} parent=1 // pred_region
      _
    $region9: #{scale_forward.1} parent=1 // pred_fallthru
      _
    // Predicated region
    $region10: #{scale_forward.1} parent=1 // pred_check
      _
    $region11: #{scale_forward.1} parent=1 // pred_check_branch
      %16 = sbr.rel (0) target = $region13
    $region12: #{scale_forward.1} parent=1 // pred_region
      _
    $region13: #{scale_forward.1} parent=1 // pred_fallthru
      _
    %p18 = scmp.eq.s32.totalorder 0, 0
    // Predicated region
    $region14: #{scale_forward.1} parent=1 // pred_check
      %p19 = pneg %p18
    $region15: #{scale_forward.1} parent=1 // pred_check_branch
      %21 = sbr.rel (%p19) target = $region17
    $region16: #{scale_forward.1} parent=1 // pred_region
      %v22 = vld [vmem:[%s3] sm:$0x1]
      %v24 = vlaneseq
      %v25 = vshrl.u32 %v24, 7
      %v26 = vsub.s32 0, %v25
      %v27 = vrot.slane %v22, %v26
      %29 = vst [vmem:[#allocation4] sm:$0xff] %v27
      %30 = vst [vmem:[#allocation4 + $0x8] sm:$0xff] %v27
    $region17: #{scale_forward.1} parent=1 // pred_fallthru
      _
    %v31 = vld [vmem:[#allocation4] sm:$0xff]
    %v32 = vld [vmem:[#allocation4 + $0x8] sm:$0xff]
    %v33 = vld [vmem:[%s1] sm:$0xf]
    %v34 = vld [vmem:[%s1 + $0x4] sm:$0xf]
    %v35 = vld [vmem:[%s2] sm:$0xf]
    %v36 = vld [vmem:[%s2 + $0x4] sm:$0xf]
    %v37 = vld [vmem:[%s2 + $0x8] sm:$0xf]
    %v38 = vld [vmem:[%s2 + $0xc] sm:$0xf]
    %v39 = vld [vmem:[%s2 + $0x10] sm:$0xf]
    %v40 = vld [vmem:[%s2 + $0x14] sm:$0xf]
    %v41 = vld [vmem:[%s2 + $0x18] sm:$0xf]
    %v42 = vld [vmem:[%s2 + $0x1c] sm:$0xf]
    %v43 = vld [vmem:[%s2 + $0x20] sm:$0xf]
    %v44 = vld [vmem:[%s2 + $0x24] sm:$0xf]
    %v45 = vld [vmem:[%s2 + $0x28] sm:$0xf]
    %v46 = vld [vmem:[%s2 + $0x2c] sm:$0xf]
    %v47 = vld [vmem:[%s2 + $0x30] sm:$0xf]
    %v48 = vld [vmem:[%s2 + $0x34] sm:$0xf]
    %v49 = vld [vmem:[%s2 + $0x38] sm:$0xf]
    %v50 = vld [vmem:[%s2 + $0x3c] sm:$0xf]
    %v53 = vunpack.c.l.b16 %v33
    %v54 = vunpack.c.l.b16 %v34
    %v55 = vpack.c.b16 %v54, %v53
    %v73 = vunpack.c.l.b16 %v35
    %v74 = vunpack.c.l.b16 %v36
    %v75 = vunpack.c.l.b16 %v37
    %v76 = vunpack.c.l.b16 %v38
    %v77 = vunpack.c.l.b16 %v39
    %v78 = vunpack.c.l.b16 %v40
    %v79 = vunpack.c.l.b16 %v41
    %v80 = vunpack.c.l.b16 %v42
    %v81 = vunpack.c.l.b16 %v43
    %v82 = vunpack.c.l.b16 %v44
    %v83 = vunpack.c.l.b16 %v45
    %v84 = vunpack.c.l.b16 %v46
    %v85 = vunpack.c.l.b16 %v47
    %v86 = vunpack.c.l.b16 %v48
    %v87 = vunpack.c.l.b16 %v49
    %v88 = vunpack.c.l.b16 %v50
    %v89 = vpack.c.b16 %v74, %v73
    %v90 = vpack.c.b16 %v76, %v75
    %v91 = vpack.c.b16 %v78, %v77
    %v92 = vpack.c.b16 %v80, %v79
    %v93 = vpack.c.b16 %v82, %v81
    %v94 = vpack.c.b16 %v84, %v83
    %v95 = vpack.c.b16 %v86, %v85
    %v96 = vpack.c.b16 %v88, %v87
    %105 = vmatprep.subr.bf16.mxu0 0
    %106 = vmatpush1.bf16.msra.mxu0 %v89
    %107 = vmatprep.subr.bf16.mxu0 0
    %108 = vmatpush1.bf16.msra.mxu0 %v90
    %109 = vmatprep.subr.bf16.mxu0 0
    %110 = vmatpush1.bf16.msra.mxu0 %v91
    %111 = vmatprep.subr.bf16.mxu0 0
    %112 = vmatpush1.bf16.msra.mxu0 %v92
    %113 = vmatprep.subr.bf16.mxu0 0
    %114 = vmatpush1.bf16.msra.mxu0 %v93
    %115 = vmatprep.subr.bf16.mxu0 0
    %116 = vmatpush1.bf16.msra.mxu0 %v94
    %117 = vmatprep.subr.bf16.mxu0 0
    %118 = vmatpush1.bf16.msra.mxu0 %v95
    %119 = vmatprep.subr.bf16.mxu0 0
    %120 = vmatpush1.bf16.msra.mxu0 %v96
    %121 = vmatprep.subr.bf16.mxu0 0
    %122 = vmatpush1.bf16.msra.mxu0 0
    %123 = vmatprep.subr.bf16.mxu0 0
    %124 = vmatpush1.bf16.msra.mxu0 0
    %125 = vmatprep.subr.bf16.mxu0 0
    %126 = vmatpush1.bf16.msra.mxu0 0
    %127 = vmatprep.subr.bf16.mxu0 0
    %128 = vmatpush1.bf16.msra.mxu0 0
    %129 = vmatprep.subr.bf16.mxu0 0
    %130 = vmatpush1.bf16.msra.mxu0 0
    %131 = vmatprep.subr.bf16.mxu0 0
    %132 = vmatpush1.bf16.msra.mxu0 0
    %133 = vmatprep.subr.bf16.mxu0 0
    %134 = vmatpush1.bf16.msra.mxu0 0
    %135 = vmatprep.subr.bf16.mxu0 0
    %136 = vmatpush1.bf16.msra.mxu0 0
    %137 = vmatprep.mubr.bf16.mxu0 0
    %138 = vmatmul.mubr.bf16.gmra.mrb[0].mxu0 %v55
    %v139 = vpop.f32.mrb[0].mxu0
    %v140 = vadd.f32 0.0, %v139
    %v141 = vpop.f32.mrb[0].mxu0
    %v142 = vpop.f32.mrb[0].mxu0
    %v143 = vadd.f32 0.0, %v142
    %v144 = vpop.f32.mrb[0].mxu0
    %145 = vdwg.mxu0
    %v146 = vadd.f32 %v31, %v140
    %v147 = vadd.f32 %v32, %v143
    %148 = vst [vmem:[#allocation4] sm:$0xff] %v146
    %149 = vst [vmem:[#allocation4 + $0x8] sm:$0xff] %v147
    // Predicated region
    $region18: #{scale_forward.1} parent=1 // pred_check
      %p150 = pneg %p18
    $region19: #{scale_forward.1} parent=1 // pred_check_branch
      %152 = sbr.rel (%p150) target = $region21
    $region20: #{scale_forward.1} parent=1 // pred_region
      %v153 = vld [vmem:[#allocation4] sm:$0xff]
      %v154 = vld [vmem:[#allocation4 + $0x8] sm:$0xff]
      %s155 = sld [smem:[#allocation3]]
      %v156 = vstv %s155
      %v157 = vmul.f32 %v153, %v156
      %v158 = vmul.f32 %v154, %v156
      %159 = vst [vmem:[#allocation4] sm:$0xff] %v157
      %160 = vst [vmem:[#allocation4 + $0x8] sm:$0xff] %v158
    $region21: #{scale_forward.1} parent=1 // pred_fallthru
      _
    // Predicated region
    $region22: #{scale_forward.1} parent=1 // pred_check
      _
    $region23: #{scale_forward.1} parent=1 // pred_check_branch
      %162 = sbr.rel (0) target = $region25
    $region24: #{scale_forward.1} parent=1 // pred_region
      %s164 = ssub.s32 256, 256
      %165 = vsyncadd [#allocation5], %s164
      %s166 = sshll.u32 [#allocation4], 4
      %s167 = int_to_ptr.vmem [resolvable:$true] %s166
      %172 = dma.vmem_to_hbm [thread:$0]  %s167, 256, %s4, [#allocation5], 128, 128, 8
    $region25: #{scale_forward.1} parent=1 // pred_fallthru
      _
    // Predicated region
    $region26: #{scale_forward.1} parent=1 // pred_check
      _
    $region27: #{scale_forward.1} parent=1 // pred_check_branch
      %174 = sbr.rel (0) target = $region29
    $region28: #{scale_forward.1} parent=1 // pred_region
      %175 = dma.done [#allocation5], 256
    $region29: #{scale_forward.1} parent=1 // pred_fallthru
      _
    %176 = vsyncpa [#allocation5], 1

</llo_original>
